<compile_context>
chip_gen: v7x
topology: tpu7x:2x2x1
jax: 0.10.0
libtpu: 0.0.40
codegen_flags: <defaults>
</compile_context>

<pallas_src>
import math

import jax
import jax.numpy as jnp
from jax.experimental import pallas as pl
from jax.experimental.pallas import tpu as pltpu

_SQRT_2_OVER_PI = math.sqrt(2.0 / math.pi)


def _gelu(x):
    # Exact reproduction of the PyTorch `gelu` (tanh approximation), f32 math.
    return 0.5 * x * (1.0 + jnp.tanh(_SQRT_2_OVER_PI * (x + 0.044715 * x * x * x)))


# ----------------------------------------------------------------------------
# Kernels
# ----------------------------------------------------------------------------
def _mlp_kernel_fused(x_ref, wfc_ref, bfc_ref, wproj_ref, bproj_ref, out_ref):
    """Both weights fully resident in VMEM; grid walks the token (M) axis."""
    x = x_ref[...]
    # c_fc: bf16 operands on the MXU, f32 accumulation.
    h = jnp.dot(x.astype(wfc_ref.dtype), wfc_ref[...],
                preferred_element_type=jnp.float32)
    h = h + bfc_ref[...].astype(jnp.float32)
    # gelu in f32 (VPU + EUP tanh); fused cast to MXU operand dtype so the
    # (TM, n_state) intermediate is only materialized once.
    h = _gelu(h).astype(wproj_ref.dtype)
    # c_proj: f32 accumulation.
    h2 = jnp.dot(h, wproj_ref[...], preferred_element_type=jnp.float32)
    h2 = h2 + bproj_ref[...].astype(jnp.float32)
    # dropout is identity at inference.
    out_ref[...] = h2.astype(out_ref.dtype)


def _mlp_kernel_chunked(x_ref, wfc_ref, bfc_ref, wproj_ref, bproj_ref,
                        out_ref, acc_ref):
    """n_state is chunked along grid axis 1 ("arbitrary"); f32 accumulator."""
    k = pl.program_id(1)

    @pl.when(k == 0)
    def _():
        acc_ref[...] = jnp.zeros_like(acc_ref)

    x = x_ref[...]
    h = jnp.dot(x.astype(wfc_ref.dtype), wfc_ref[...],
                preferred_element_type=jnp.float32)
    h = h + bfc_ref[...].astype(jnp.float32)
    h = _gelu(h).astype(wproj_ref.dtype)
    acc_ref[...] += jnp.dot(h, wproj_ref[...], preferred_element_type=jnp.float32)

    @pl.when(k == pl.num_programs(1) - 1)
    def _():
        out_ref[...] = (acc_ref[...]
                        + bproj_ref[...].astype(jnp.float32)).astype(out_ref.dtype)


# ----------------------------------------------------------------------------
# Wrapper
# ----------------------------------------------------------------------------
def _vmem_capacity_bytes():
    try:
        return int(pltpu.get_tpu_info().vmem_capacity_bytes)
    except Exception:
        return 64 * 1024 * 1024   # conservative (v7x per-TC VMEM)


def _round_up(x, m):
    return ((x + m - 1) // m) * m


def _spec(shape, index_map, single_buffer=False):
    """BlockSpec; resident (constant-index) operands get a single buffer."""
    if single_buffer:
        try:
            return pl.BlockSpec(shape, index_map, pipeline_mode=pl.Buffered(1))
        except TypeError:
            pass   # older jax without pipeline_mode: fall back to default
    return pl.BlockSpec(shape, index_map)


def mlp_forward(x, w_fc, b_fc, w_proj, b_proj, *, use_bf16=True,
                force_chunked=False):
    """x: (B, S, nx). Returns (B, S, nx) in x's dtype (f32 or bf16)."""
    B, S, nx = x.shape
    n_state = w_fc.shape[1]
    M = B * S
    x2d = x.reshape(M, nx)
    out_dtype = x.dtype

    vmem_cap = _vmem_capacity_bytes()
    vmem_budget = int(0.70 * vmem_cap)          # what the resident data may use
    vmem_limit = max(32 * 1024 * 1024, int(0.85 * vmem_cap))

    # Precision: bf16 matmul operands, f32 accumulation / gelu.
    # use_bf16=False is a precision/debug path (f32 MXU operands are slow).
    wdtype = jnp.bfloat16 if use_bf16 else jnp.float32
    w_fc_c = w_fc.astype(wdtype)
    w_proj_c = w_proj.astype(wdtype)
    b_fc_c = b_fc.reshape(1, -1).astype(jnp.float32)
    b_proj_c = b_proj.reshape(1, -1).astype(jnp.float32)

    x_item = jnp.dtype(x.dtype).itemsize
    w_item = jnp.dtype(wdtype).itemsize

    # --- token tile size -----------------------------------------------------
    # 128-MiB VMEM parts (v5e/v6e) -> TM=512; 64-MiB (v7x) -> TM=256.
    tm = 512 if vmem_cap >= 100 * 1024 * 1024 else 256
    if M <= tm:
        tm_eff = max(8, _round_up(M, 8))
    elif M <= 2 * tm:
        # two half-tiles instead of one padded tile -> both v7x TCs get work
        tm_eff = max(8, _round_up(-(-M // 2), 8))
    else:
        tm_eff = tm

    # --- path selection: resident weights vs n_state-chunked ------------------
    simple_bytes = (2 * nx * n_state * w_item              # W_fc + W_proj (1 buf)
                    + (n_state + nx) * 4                    # biases
                    + 4 * tm_eff * nx * x_item              # x/out tiles, 2 bufs
                    + tm_eff * n_state * (4 + w_item))      # f32 h + bf16 copy
    use_chunked = force_chunked or (simple_bytes > vmem_budget)

    tk = None
    if use_chunked:
        for cand in (1024, 512, 256, 128):
            if n_state % cand == 0:
                tk = cand
                break
        if tk is None:
            use_chunked = False   # tiny n_state; the simple path fits anyway

    if use_chunked:
        def chunked_bytes(tm_, tk_):
            return (4 * nx * tk_ * w_item        # W_fc/W_proj chunks, 2 bufs each
                    + 2 * tk_ * 4 + nx * 4       # biases
                    + 4 * tm_ * nx * x_item      # x/out tiles, 2 bufs
                    + tm_ * nx * 4               # f32 accumulator scratch
                    + tm_ * tk_ * (4 + w_item))  # h chunk temp
        while chunked_bytes(tm_eff, tk) > vmem_budget and tm_eff > 64:
            tm_eff = max(64, tm_eff // 2)

    # --- pad M so every tile is full ------------------------------------------
    m_pad = _round_up(M, tm_eff)
    if m_pad != M:
        # NOTE: padded rows hold gelu(b_fc) @ W_proj + b_proj garbage; they are
        # sliced off below and must not be consumed unsliced.
        x2d = jnp.pad(x2d, ((0, m_pad - M), (0, 0)))
    grid_m = m_pad // tm_eff

    # --- cost estimate ---------------------------------------------------------
    cost = pl.CostEstimate(
        flops=4 * m_pad * nx * n_state,           # two matmuls, 2*M*K*N each
        transcendentals=m_pad * n_state,          # tanh in gelu
        bytes_accessed=int(2 * m_pad * nx * x_item
                           + 2 * nx * n_state * w_item
                           + (n_state + nx) * 4),
    )

    # --- specs / kernel --------------------------------------------------------
    if not use_chunked:
        grid = (grid_m,)
        in_specs = [
            pl.BlockSpec((tm_eff, nx), lambda i: (i, 0)),
            _spec((nx, n_state), lambda i: (0, 0), single_buffer=True),
            _spec((1, n_state), lambda i: (0, 0), single_buffer=True),
            _spec((n_state, nx), lambda i: (0, 0), single_buffer=True),
            _spec((1, nx), lambda i: (0, 0), single_buffer=True),
        ]
        out_specs = pl.BlockSpec((tm_eff, nx), lambda i: (i, 0))
        scratch = []
        kernel = _mlp_kernel_fused
        dims = ("parallel",)
    else:
        grid = (grid_m, n_state // tk)
        in_specs = [
            pl.BlockSpec((tm_eff, nx), lambda i, k: (i, 0)),
            pl.BlockSpec((nx, tk), lambda i, k: (0, k)),
            pl.BlockSpec((1, tk), lambda i, k: (0, k)),
            pl.BlockSpec((tk, nx), lambda i, k: (k, 0)),
            _spec((1, nx), lambda i, k: (0, 0), single_buffer=True),
        ]
        out_specs = pl.BlockSpec((tm_eff, nx), lambda i, k: (i, 0))
        scratch = [pltpu.VMEM((tm_eff, nx), jnp.float32)]
        kernel = _mlp_kernel_chunked
        dims = ("parallel", "arbitrary")

    out2d = pl.pallas_call(
        kernel,
        out_shape=jax.ShapeDtypeStruct((m_pad, nx), out_dtype),
        grid_spec=pltpu.PrefetchScalarGridSpec(
            num_scalar_prefetch=0,
            grid=grid,
            in_specs=in_specs,
            out_specs=out_specs,
            scratch_shapes=scratch),
        compiler_params=pltpu.CompilerParams(
            dimension_semantics=dims,
            vmem_limit_bytes=vmem_limit),
        cost_estimate=cost,
    )(x2d, w_fc_c, b_fc_c, w_proj_c, b_proj_c)

    return out2d[:M].reshape(B, S, nx)


# ----------------------------------------------------------------------------
# Reference + test
# ----------------------------------------------------------------------------
def reference_mlp(x, w_fc, b_fc, w_proj, b_proj):
    h = _gelu(jnp.einsum("bse,ef->bsf", x, w_fc) + b_fc.reshape(-1))
    return jnp.einsum("bsf,fe->bse", h, w_proj) + b_proj.reshape(-1)


if __name__ == "__main__":
    key = jax.random.PRNGKey(0)

    def make_params(k, n_embd, n_state):
        kx, kwf, kbf, kwp, kbp = jax.random.split(k, 5)
        x = jax.random.normal(kx, (2, 8, n_embd), dtype=jnp.float32)
        w_fc = 0.02 * jax.random.normal(kwf, (n_embd, n_state), dtype=jnp.float32)
        b_fc = 0.02 * jax.random.normal(kbf, (1, n_state), dtype=jnp.float32)
        w_proj = 0.02 * jax.random.normal(kwp, (n_state, n_embd), dtype=jnp.float32)
        b_proj = 0.02 * jax.random.normal(kbp, (1, n_embd), dtype=jnp.float32)
        return x, w_fc, b_fc, w_proj, b_proj

    k1, k2 = jax.random.split(key)

    # 1) Small module-consistent shapes (n_embd=32, n_state=4*n_embd=128),
    #    exercises the resident-weight fused path.
    x, w_fc, b_fc, w_proj, b_proj = make_params(k1, 32, 128)
    out = mlp_forward(x, w_fc, b_fc, w_proj, b_proj)
    jax.block_until_ready(out)
    ref = reference_mlp(x, w_fc, b_fc, w_proj, b_proj)
    assert out.shape == x.shape
    assert jnp.allclose(out, ref, atol=1e-2, rtol=5e-2), "fused path mismatch"

    # 2) Exercise the n_state-chunked fallback path (n_embd=128, n_state=512,
    #    tk=128 -> 4 reduction chunks), forced so it runs at small scale too.
    x2, w_fc2, b_fc2, w_proj2, b_proj2 = make_params(k2, 128, 512)
    out2 = mlp_forward(x2, w_fc2, b_fc2, w_proj2, b_proj2, force_chunked=True)
    jax.block_until_ready(out2)
    ref2 = reference_mlp(x2, w_fc2, b_fc2, w_proj2, b_proj2)
    assert out2.shape == x2.shape
    assert jnp.allclose(out2, ref2, atol=1e-2, rtol=5e-2), "chunked path mismatch"

    print("KERNEL_OK")
</pallas_src>

<mosaic_0001>
module attributes {stable_mosaic.version = 11 : i64} {
  func.func @_mlp_kernel_fused(%arg0: i32, %arg1: memref<16x32xf32, #tpu.memory_space<vmem>>, %arg2: memref<32x128xbf16, #tpu.memory_space<vmem>>, %arg3: memref<1x128xf32, #tpu.memory_space<vmem>>, %arg4: memref<128x32xbf16, #tpu.memory_space<vmem>>, %arg5: memref<1x32xf32, #tpu.memory_space<vmem>>, %arg6: memref<16x32xf32, #tpu.memory_space<vmem>>) attributes {dimension_semantics = [#tpu.dimension_semantics<parallel>], iteration_bounds = array<i64: 1>, scalar_prefetch = 0 : i64, scratch_operands = 0 : i64, tpu.core_type = #tpu.core_type<tc>, window_params = [{transform_indices = @transform_0, window_bounds = array<i64: 16, 32>}, {pipeline_mode = #tpu.pipeline_mode<synchronous>, transform_indices = @transform_1, window_bounds = array<i64: 32, 128>}, {pipeline_mode = #tpu.pipeline_mode<synchronous>, transform_indices = @transform_2, window_bounds = array<i64: 1, 128>}, {pipeline_mode = #tpu.pipeline_mode<synchronous>, transform_indices = @transform_3, window_bounds = array<i64: 128, 32>}, {pipeline_mode = #tpu.pipeline_mode<synchronous>, transform_indices = @transform_4, window_bounds = array<i64: 1, 32>}, {transform_indices = @transform_5, window_bounds = array<i64: 16, 32>}]} {
    %c0 = arith.constant 0 : index
    %c0_0 = arith.constant 0 : index
    %0 = vector.load %arg1[%c0, %c0_0] : memref<16x32xf32, #tpu.memory_space<vmem>>, vector<16x32xf32>
    %1 = arith.truncf %0 : vector<16x32xf32> to vector<16x32xbf16>
    %c0_1 = arith.constant 0 : index
    %c0_2 = arith.constant 0 : index
    %2 = vector.load %arg2[%c0_1, %c0_2] : memref<32x128xbf16, #tpu.memory_space<vmem>>, vector<32x128xbf16>
    %cst = arith.constant dense<0.000000e+00> : vector<16x128xf32>
    %3 = tpu.matmul %1, %2, %cst {dimension_numbers = #tpu.dot_dimension_numbers<[1], [0], [0], [1], [0, 0, 1, 1], [], []>} : vector<16x32xbf16>, vector<32x128xbf16>, vector<16x128xf32> -> vector<16x128xf32>
    %c0_3 = arith.constant 0 : index
    %c0_4 = arith.constant 0 : index
    %4 = vector.load %arg3[%c0_3, %c0_4] : memref<1x128xf32, #tpu.memory_space<vmem>>, vector<1x128xf32>
    %5 = vector.broadcast %4 : vector<1x128xf32> to vector<16x128xf32>
    %6 = arith.addf %3, %5 : vector<16x128xf32>
    %cst_5 = arith.constant 5.000000e-01 : f32
    %7 = vector.broadcast %cst_5 : f32 to vector<16x128xf32>
    %8 = arith.mulf %7, %6 : vector<16x128xf32>
    %cst_6 = arith.constant 4.471500e-02 : f32
    %9 = vector.broadcast %cst_6 : f32 to vector<16x128xf32>
    %10 = arith.mulf %9, %6 : vector<16x128xf32>
    %11 = arith.mulf %10, %6 : vector<16x128xf32>
    %12 = arith.mulf %11, %6 : vector<16x128xf32>
    %13 = arith.addf %6, %12 : vector<16x128xf32>
    %cst_7 = arith.constant 0.797884583 : f32
    %14 = vector.broadcast %cst_7 : f32 to vector<16x128xf32>
    %15 = arith.mulf %14, %13 : vector<16x128xf32>
    %16 = math.tanh %15 : vector<16x128xf32>
    %cst_8 = arith.constant 1.000000e+00 : f32
    %17 = vector.broadcast %cst_8 : f32 to vector<16x128xf32>
    %18 = arith.addf %17, %16 : vector<16x128xf32>
    %19 = arith.mulf %8, %18 : vector<16x128xf32>
    %20 = arith.truncf %19 : vector<16x128xf32> to vector<16x128xbf16>
    %c0_9 = arith.constant 0 : index
    %c0_10 = arith.constant 0 : index
    %21 = vector.load %arg4[%c0_9, %c0_10] : memref<128x32xbf16, #tpu.memory_space<vmem>>, vector<128x32xbf16>
    %cst_11 = arith.constant dense<0.000000e+00> : vector<16x32xf32>
    %22 = tpu.matmul %20, %21, %cst_11 {dimension_numbers = #tpu.dot_dimension_numbers<[1], [0], [0], [1], [0, 0, 1, 1], [], []>} : vector<16x128xbf16>, vector<128x32xbf16>, vector<16x32xf32> -> vector<16x32xf32>
    %c0_12 = arith.constant 0 : index
    %c0_13 = arith.constant 0 : index
    %23 = vector.load %arg5[%c0_12, %c0_13] : memref<1x32xf32, #tpu.memory_space<vmem>>, vector<1x32xf32>
    %24 = vector.broadcast %23 : vector<1x32xf32> to vector<16x32xf32>
    %25 = arith.addf %22, %24 : vector<16x32xf32>
    %c0_14 = arith.constant 0 : index
    %c0_15 = arith.constant 0 : index
    %26 = vector.load %arg6[%c0_14, %c0_15] : memref<16x32xf32, #tpu.memory_space<vmem>>, vector<16x32xf32>
    tpu.vector_store %arg6[%c0_14, %c0_15], %25 {strides = array<i32>} : memref<16x32xf32, #tpu.memory_space<vmem>>, vector<16x32xf32>,
    return
  }
  func.func @transform_0(%arg0: i32) -> (i32, i32) {
    %c0_i32 = arith.constant 0 : i32
    %c0_i32_0 = arith.constant 0 : i32
    return %arg0, %c0_i32 : i32, i32
  }
  func.func @transform_1(%arg0: i32) -> (i32, i32) {
    %c0_i32 = arith.constant 0 : i32
    %c0_i32_0 = arith.constant 0 : i32
    %c0_i32_1 = arith.constant 0 : i32
    return %c0_i32, %c0_i32_0 : i32, i32
  }
  func.func @transform_2(%arg0: i32) -> (i32, i32) {
    %c0_i32 = arith.constant 0 : i32
    %c0_i32_0 = arith.constant 0 : i32
    %c0_i32_1 = arith.constant 0 : i32
    return %c0_i32, %c0_i32_0 : i32, i32
  }
  func.func @transform_3(%arg0: i32) -> (i32, i32) {
    %c0_i32 = arith.constant 0 : i32
    %c0_i32_0 = arith.constant 0 : i32
    %c0_i32_1 = arith.constant 0 : i32
    return %c0_i32, %c0_i32_0 : i32, i32
  }
  func.func @transform_4(%arg0: i32) -> (i32, i32) {
    %c0_i32 = arith.constant 0 : i32
    %c0_i32_0 = arith.constant 0 : i32
    %c0_i32_1 = arith.constant 0 : i32
    return %c0_i32, %c0_i32_0 : i32, i32
  }
  func.func @transform_5(%arg0: i32) -> (i32, i32) {
    %c0_i32 = arith.constant 0 : i32
    %c0_i32_0 = arith.constant 0 : i32
    return %arg0, %c0_i32 : i32, i32
  }
}

</mosaic_0001>

<llo_original>
// kernel: tpu_custom_call.1
$region0: #{tpu_custom_call.1}
  #allocation0 [shape = 'u32[]', space=smem, size = 0x4, offset = 0x4, fixed_abs, tag = 'smem constant byte address 0x4 - core index']
  #allocation1 [shape = 'u32[144,128]{1,0:T(1,128)}', space=vmem, size = 0x12000, scoped, tag = 'internal scratch']
  %s0 = inlined_call_operand.vmem [shape: f32[16,32], index: 0, kind: input, shape index: {}]
  %s1 = inlined_call_operand.vmem [shape: bf16[32,128], index: 1, kind: input, shape index: {}]
  %s2 = inlined_call_operand.vmem [shape: f32[1,128], index: 2, kind: input, shape index: {}]
  %s3 = inlined_call_operand.vmem [shape: bf16[128,32], index: 3, kind: input, shape index: {}]
  %s4 = inlined_call_operand.vmem [shape: f32[1,32], index: 4, kind: input, shape index: {}]
  %s5 = inlined_call_operand.hbm [shape: f32[16,32], index: 5, kind: output, shape index: {}]
  %s6 = sld [smem:[#allocation0]]
  $region30: #{tpu_custom_call.1} parent=0
    _
  %s8 = ssub.s32 1, %s6
  %s9 = scalar_select 0, %s8, %s6
  $region1: #{tpu_custom_call.1} parent=0
    #allocation2 [shape = 'u8[8192]{0}', space=vmem, size = 0x2000, scoped, tag = 'output window, operand 0, single buffered']
    #allocation3 [shape = 's32[1]{0}', space=sflag, size = 0x4, scoped, tag = 'scoped memory for tpu_custom_call.1']
    %10 = vsyncpa [#allocation3], 0
    // Predicated region
    $region2: #{tpu_custom_call.1} parent=1 // pred_check
      _
    $region3: #{tpu_custom_call.1} parent=1 // pred_check_branch
      %12 = sbr.rel (0) target = $region5
    $region4: #{tpu_custom_call.1} parent=1 // pred_region
      _
    $region5: #{tpu_custom_call.1} parent=1 // pred_fallthru
      _
    // Predicated region
    $region6: #{tpu_custom_call.1} parent=1 // pred_check
      _
    $region7: #{tpu_custom_call.1} parent=1 // pred_check_branch
      %14 = sbr.rel (0) target = $region9
    $region8: #{tpu_custom_call.1} parent=1 // pred_region
      _
    $region9: #{tpu_custom_call.1} parent=1 // pred_fallthru
      _
    // Predicated region
    $region10: #{tpu_custom_call.1} parent=1 // pred_check
      _
    $region11: #{tpu_custom_call.1} parent=1 // pred_check_branch
      %16 = sbr.rel (0) target = $region13
    $region12: #{tpu_custom_call.1} parent=1 // pred_region
      _
    $region13: #{tpu_custom_call.1} parent=1 // pred_fallthru
      _
    // Predicated region
    $region14: #{tpu_custom_call.1} parent=1 // pred_check
      _
    $region15: #{tpu_custom_call.1} parent=1 // pred_check_branch
      %18 = sbr.rel (0) target = $region17
    $region16: #{tpu_custom_call.1} parent=1 // pred_region
      _
    $region17: #{tpu_custom_call.1} parent=1 // pred_fallthru
      _
    // Predicated region
    $region18: #{tpu_custom_call.1} parent=1 // pred_check
      _
    $region19: #{tpu_custom_call.1} parent=1 // pred_check_branch
      %20 = sbr.rel (0) target = $region21
    $region20: #{tpu_custom_call.1} parent=1 // pred_region
      _
    $region21: #{tpu_custom_call.1} parent=1 // pred_fallthru
      _
    %v22 = vld [vmem:[%s0] sm:$0xff]
    %v23 = vld [vmem:[%s0 + $0x8] sm:$0xff]
    %v24 = vpack.c.bf16 %v23, %v22
    %v25 = vld [vmem:[%s1] sm:$0xf]
    %v26 = vld [vmem:[%s1 + $0x4] sm:$0xf]
    %v27 = vld [vmem:[%s1 + $0x8] sm:$0xf]
    %v28 = vld [vmem:[%s1 + $0xc] sm:$0xf]
    %v29 = vld [vmem:[%s2] sm:$0x1]
    %v31 = vlaneseq
    %v32 = vshrl.u32 %v31, 7
    %v33 = vsub.s32 0, %v32
    %v34 = vrot.slane %v29, %v33
    %v40 = vunpack.c.l.b16 %v25
    %v41 = vunpack.c.l.b16 %v26
    %v42 = vunpack.c.l.b16 %v27
    %v43 = vunpack.c.l.b16 %v28
    %v44 = vpack.c.b16 %v41, %v40
    %v45 = vpack.c.b16 %v43, %v42
    %vm48 = vcmask 261120
    %v50 = vsel %vm48, %v24, 0
    %52 = vmatprep.subr.bf16.mxu0 0
    %53 = vmatpush1.bf16.msra.mxu0 %v44
    %54 = vmatprep.subr.bf16.mxu0 0
    %55 = vmatpush1.bf16.msra.mxu0 %v45
    %56 = vmatprep.subr.bf16.mxu0 0
    %57 = vmatpush1.bf16.msra.mxu0 0
    %58 = vmatprep.subr.bf16.mxu0 0
    %59 = vmatpush1.bf16.msra.mxu0 0
    %60 = vmatprep.subr.bf16.mxu0 0
    %61 = vmatpush1.bf16.msra.mxu0 0
    %62 = vmatprep.subr.bf16.mxu0 0
    %63 = vmatpush1.bf16.msra.mxu0 0
    %64 = vmatprep.subr.bf16.mxu0 0
    %65 = vmatpush1.bf16.msra.mxu0 0
    %66 = vmatprep.subr.bf16.mxu0 0
    %67 = vmatpush1.bf16.msra.mxu0 0
    %68 = vmatprep.subr.bf16.mxu0 0
    %69 = vmatpush1.bf16.msra.mxu0 0
    %70 = vmatprep.subr.bf16.mxu0 0
    %71 = vmatpush1.bf16.msra.mxu0 0
    %72 = vmatprep.subr.bf16.mxu0 0
    %73 = vmatpush1.bf16.msra.mxu0 0
    %74 = vmatprep.subr.bf16.mxu0 0
    %75 = vmatpush1.bf16.msra.mxu0 0
    %76 = vmatprep.subr.bf16.mxu0 0
    %77 = vmatpush1.bf16.msra.mxu0 0
    %78 = vmatprep.subr.bf16.mxu0 0
    %79 = vmatpush1.bf16.msra.mxu0 0
    %80 = vmatprep.subr.bf16.mxu0 0
    %81 = vmatpush1.bf16.msra.mxu0 0
    %82 = vmatprep.subr.bf16.mxu0 0
    %83 = vmatpush1.bf16.msra.mxu0 0
    %84 = vmatprep.mubr.bf16.mxu0 0
    %85 = vmatmul.mubr.bf16.gmra.mrb[0].mxu0 %v50
    %v86 = vpop.f32.mrb[0].mxu0
    %v87 = vadd.f32 %v34, %v86
    %v88 = vpop.f32.mrb[0].mxu0
    %v89 = vpop.f32.mrb[0].mxu0
    %v90 = vadd.f32 %v34, %v89
    %v91 = vpop.f32.mrb[0].mxu0
    %92 = vdwg.mxu0
    %v93 = vmul.f32 %v87, 0.5
    %v94 = vmul.f32 %v90, 0.5
    %v95 = vmul.f32 %v87, 0.044715
    %v96 = vmul.f32 %v90, 0.044715
    %v97 = vmul.f32 %v95, %v87
    %v98 = vmul.f32 %v96, %v90
    %v99 = vmul.f32 %v97, %v87
    %v100 = vmul.f32 %v98, %v90
    %v101 = vadd.f32 %v87, %v99
    %v102 = vadd.f32 %v90, %v100
    %v103 = vmul.f32 %v101, 0.7978846
    %v104 = vmul.f32 %v102, 0.7978846
    %v105 = vtanh.pop %v103
    %v106 = vtanh.pop %v104
    %v107 = vadd.f32 %v105, 1.0
    %v108 = vadd.f32 %v106, 1.0
    %v109 = vmul.f32 %v93, %v107
    %v110 = vmul.f32 %v94, %v108
    %v111 = vpack.c.bf16 %v110, %v109
    %v112 = vld [vmem:[%s3] sm:$0xf]
    %v113 = vld [vmem:[%s3 + $0x4] sm:$0xf]
    %v114 = vld [vmem:[%s3 + $0x8] sm:$0xf]
    %v115 = vld [vmem:[%s3 + $0xc] sm:$0xf]
    %v116 = vld [vmem:[%s3 + $0x10] sm:$0xf]
    %v117 = vld [vmem:[%s3 + $0x14] sm:$0xf]
    %v118 = vld [vmem:[%s3 + $0x18] sm:$0xf]
    %v119 = vld [vmem:[%s3 + $0x1c] sm:$0xf]
    %v120 = vld [vmem:[%s3 + $0x20] sm:$0xf]
    %v121 = vld [vmem:[%s3 + $0x24] sm:$0xf]
    %v122 = vld [vmem:[%s3 + $0x28] sm:$0xf]
    %v123 = vld [vmem:[%s3 + $0x2c] sm:$0xf]
    %v124 = vld [vmem:[%s3 + $0x30] sm:$0xf]
    %v125 = vld [vmem:[%s3 + $0x34] sm:$0xf]
    %v126 = vld [vmem:[%s3 + $0x38] sm:$0xf]
    %v127 = vld [vmem:[%s3 + $0x3c] sm:$0xf]
    %v128 = vld [vmem:[%s4] sm:$0x1]
    %v130 = vlaneseq
    %v131 = vshrl.u32 %v130, 7
    %v132 = vsub.s32 0, %v131
    %v133 = vrot.slane %v128, %v132
    %v151 = vunpack.c.l.b16 %v112
    %v152 = vunpack.c.l.b16 %v113
    %v153 = vunpack.c.l.b16 %v114
    %v154 = vunpack.c.l.b16 %v115
    %v155 = vunpack.c.l.b16 %v116
    %v156 = vunpack.c.l.b16 %v117
    %v157 = vunpack.c.l.b16 %v118
    %v158 = vunpack.c.l.b16 %v119
    %v159 = vunpack.c.l.b16 %v120
    %v160 = vunpack.c.l.b16 %v121
    %v161 = vunpack.c.l.b16 %v122
    %v162 = vunpack.c.l.b16 %v123
    %v163 = vunpack.c.l.b16 %v124
    %v164 = vunpack.c.l.b16 %v125
    %v165 = vunpack.c.l.b16 %v126
    %v166 = vunpack.c.l.b16 %v127
    %v167 = vpack.c.b16 %v152, %v151
    %v168 = vpack.c.b16 %v154, %v153
    %v169 = vpack.c.b16 %v156, %v155
    %v170 = vpack.c.b16 %v158, %v157
    %v171 = vpack.c.b16 %v160, %v159
    %v172 = vpack.c.b16 %v162, %v161
    %v173 = vpack.c.b16 %v164, %v163
    %v174 = vpack.c.b16 %v166, %v165
    %183 = vmatprep.subr.bf16.mxu0 0
    %184 = vmatpush1.bf16.msra.mxu0 %v167
    %185 = vmatprep.subr.bf16.mxu0 0
    %186 = vmatpush1.bf16.msra.mxu0 %v168
    %187 = vmatprep.subr.bf16.mxu0 0
    %188 = vmatpush1.bf16.msra.mxu0 %v169
    %189 = vmatprep.subr.bf16.mxu0 0
    %190 = vmatpush1.bf16.msra.mxu0 %v170
    %191 = vmatprep.subr.bf16.mxu0 0
    %192 = vmatpush1.bf16.msra.mxu0 %v171
    %193 = vmatprep.subr.bf16.mxu0 0
    %194 = vmatpush1.bf16.msra.mxu0 %v172
    %195 = vmatprep.subr.bf16.mxu0 0
    %196 = vmatpush1.bf16.msra.mxu0 %v173
    %197 = vmatprep.subr.bf16.mxu0 0
    %198 = vmatpush1.bf16.msra.mxu0 %v174
    %199 = vmatprep.subr.bf16.mxu0 0
    %200 = vmatpush1.bf16.msra.mxu0 0
    %201 = vmatprep.subr.bf16.mxu0 0
    %202 = vmatpush1.bf16.msra.mxu0 0
    %203 = vmatprep.subr.bf16.mxu0 0
    %204 = vmatpush1.bf16.msra.mxu0 0
    %205 = vmatprep.subr.bf16.mxu0 0
    %206 = vmatpush1.bf16.msra.mxu0 0
    %207 = vmatprep.subr.bf16.mxu0 0
    %208 = vmatpush1.bf16.msra.mxu0 0
    %209 = vmatprep.subr.bf16.mxu0 0
    %210 = vmatpush1.bf16.msra.mxu0 0
    %211 = vmatprep.subr.bf16.mxu0 0
    %212 = vmatpush1.bf16.msra.mxu0 0
    %213 = vmatprep.subr.bf16.mxu0 0
    %214 = vmatpush1.bf16.msra.mxu0 0
    %215 = vmatprep.mubr.bf16.mxu0 0
    %216 = vmatmul.mubr.bf16.gmra.mrb[0].mxu0 %v111
    %v217 = vpop.f32.mrb[0].mxu0
    %v218 = vadd.f32 %v133, %v217
    %v219 = vpop.f32.mrb[0].mxu0
    %v220 = vpop.f32.mrb[0].mxu0
    %v221 = vadd.f32 %v133, %v220
    %v222 = vpop.f32.mrb[0].mxu0
    %223 = vdwg.mxu0
    %224 = vst.msk [vmem:[#allocation2] sm:$0xff] %vm48, %v218
    %225 = vst.msk [vmem:[#allocation2 + $0x8] sm:$0xff] %vm48, %v221
    // Predicated region
    $region22: #{tpu_custom_call.1} parent=1 // pred_check
      _
    $region23: #{tpu_custom_call.1} parent=1 // pred_check_branch
      %227 = sbr.rel (0) target = $region25
    $region24: #{tpu_custom_call.1} parent=1 // pred_region
      %s229 = ssub.s32 256, 256
      %230 = vsyncadd [#allocation3], %s229
      %s231 = sshll.u32 [#allocation2], 4
      %s232 = int_to_ptr.vmem [resolvable:$true] %s231
      %237 = dma.vmem_to_hbm [thread:$0]  %s232, 256, %s5, [#allocation3], 128, 128, 8
    $region25: #{tpu_custom_call.1} parent=1 // pred_fallthru
      _
    // Predicated region
    $region26: #{tpu_custom_call.1} parent=1 // pred_check
      _
    $region27: #{tpu_custom_call.1} parent=1 // pred_check_branch
      %239 = sbr.rel (0) target = $region29
    $region28: #{tpu_custom_call.1} parent=1 // pred_region
      %240 = dma.done [#allocation3], 256
    $region29: #{tpu_custom_call.1} parent=1 // pred_fallthru
      _
    %241 = vsyncpa [#allocation3], 1

</llo_original>
